<compile_context>
chip_gen: v5e
topology: v5e:2x2
jax: 0.10.0
libtpu: 0.0.40
codegen_flags: <defaults>
</compile_context>

<pallas_src>
import jax
import jax.numpy as jnp
from jax.experimental import pallas as pl
from jax.experimental.pallas import tpu as pltpu

WINDOW_SIZES = [1, 2, 3]


def _round_up(x, m):
    return (x + m - 1) // m * m


# ----------------------------------------------------------------------------
# Kernel 1: RGCN 'bdd' per-edge messages (relation-grouped edge tiles, MXU)
# ----------------------------------------------------------------------------
def rgcn_msg_kernel(wt_ref, wr_ref, wv_ref, wf_ref,      # scalar prefetch (SMEM)
                    hsrc_ref, rel_ref, norm_ref, w_ref,   # VMEM inputs
                    msg_ref):                             # VMEM output (accumulated)
    w = pl.program_id(0)
    r = wr_ref[w]
    # edges of this tile that belong to relation r (and this work item is real)
    mask = (rel_ref[...] == r) & (wv_ref[w] > 0)          # (TE, 1) bool
    scale = jnp.where(mask, norm_ref[...], 0.0)           # (TE, 1) f32
    hsrc = hsrc_ref[...]                                   # (TE, D) bf16
    nb, si = w_ref.shape[1], w_ref.shape[2]
    # block-diagonal decomposition -> nb small per-base MXU matmuls
    parts = [
        jnp.dot(hsrc[:, b * si:(b + 1) * si], w_ref[0, b],
                preferred_element_type=jnp.float32)        # (TE, so)
        for b in range(nb)
    ]
    msg = jnp.concatenate(parts, axis=-1) * scale          # (TE, D) f32

    @pl.when(wf_ref[w] == 1)                               # first visit of this tile
    def _():
        msg_ref[...] = jnp.zeros_like(msg_ref)

    msg_ref[...] += msg


# ----------------------------------------------------------------------------
# Kernel 2: RGCN combine: agg + h @ loop_w + bias   (node-tiled)
# ----------------------------------------------------------------------------
def rgcn_combine_kernel(agg_ref, h_ref, loopw_ref, bias_ref, out_ref):
    out_ref[...] = (agg_ref[...]
                    + jnp.dot(h_ref[...], loopw_ref[...],
                              preferred_element_type=jnp.float32)
                    + bias_ref[...])


# ----------------------------------------------------------------------------
# Kernel 3: Desc2VecCNN (all window sizes fused into one matmul, batch-tiled)
# ----------------------------------------------------------------------------
def desc_cnn_kernel(x_ref, wcat_ref, bcat_ref, fcw_ref, fcb_ref, out_ref):
    bt, seq, d = x_ref.shape
    n_shift = wcat_ref.shape[0] // d                       # = max(window_sizes)
    x = x_ref[...]                                          # (bt, L, D) bf16
    cols = [x]
    for k in range(1, n_shift):
        # circular pad (0, ws-1) + Conv1d  <=>  position t uses x[(t+k) mod L]
        cols.append(jnp.concatenate([x[:, k:, :], x[:, :k, :]], axis=1))
    xs = jnp.concatenate(cols, axis=-1).reshape(bt * seq, n_shift * d)
    # one MXU matmul covers all window sizes (zero rows for short windows)
    y = jnp.dot(xs, wcat_ref[...], preferred_element_type=jnp.float32)
    y = jnp.maximum(y + bcat_ref[...], 0.0)                 # bias + ReLU
    feats = jnp.max(y.reshape(bt, seq, -1), axis=1)         # global maxpool (B, 3D)
    # dropout p=0 is a no-op; fc
    out_ref[...] = (jnp.dot(feats.astype(jnp.bfloat16), fcw_ref[...],
                            preferred_element_type=jnp.float32) + fcb_ref[...])


# ----------------------------------------------------------------------------
# Wrappers (glue + pallas_call)
# ----------------------------------------------------------------------------
def rgcn_bdd_layer(h, src, dst, rel, norm, bdd_w, loop_w, bias, num_nodes,
                   *, tile_e=512, tile_n=256):
    """RelGraphConv(h_dim, h_dim, num_rels, 'bdd', num_bases, self_loop=True)."""
    R, nb, si, so = bdd_w.shape
    D = nb * si
    E = src.shape[0]
    i32 = jnp.int32

    tile_e = min(tile_e, _round_up(E, 8))
    e_pad = _round_up(E, tile_e)
    t_tiles = e_pad // tile_e
    pad = e_pad - E

    # pad edges; padded edges get norm=0 -> zero contribution
    src_p = jnp.concatenate([src.astype(i32), jnp.zeros((pad,), i32)])
    dst_p = jnp.concatenate([dst.astype(i32), jnp.zeros((pad,), i32)])
    rel_p = jnp.concatenate([rel.astype(i32), jnp.zeros((pad,), i32)])
    norm_p = jnp.concatenate([norm.astype(jnp.float32),
                              jnp.zeros((pad, 1), jnp.float32)])

    # group edges by relation so every tile spans a narrow contiguous rel range
    order = jnp.argsort(rel_p)
    src_s, dst_s = src_p[order], dst_p[order]
    rel_s, norm_s = rel_p[order], norm_p[order]
    h_src = h[src_s].astype(jnp.bfloat16)                   # (e_pad, D) gather (glue)
    rel_col = rel_s[:, None]

    # (tile, relation) work list; static worst-case length t_tiles + R - 1
    rel_tiles = rel_s.reshape(t_tiles, tile_e)
    r_lo, r_hi = rel_tiles[:, 0], rel_tiles[:, -1]
    n_work = r_hi - r_lo + 1                                 # work items per tile
    start = jnp.cumsum(n_work) - n_work                      # exclusive cumsum
    total = start[-1] + n_work[-1]
    n_w = t_tiles + R - 1                                    # static grid size
    w_idx = jnp.arange(n_w, dtype=i32)
    work_tile = jnp.clip(jnp.searchsorted(start, w_idx, side="right") - 1,
                         0, t_tiles - 1).astype(i32)
    work_rel = jnp.clip(r_lo[work_tile] + (w_idx - start[work_tile]),
                        0, R - 1).astype(i32)
    work_valid = (w_idx < total).astype(i32)
    work_first = (w_idx == start[work_tile]).astype(i32)

    edge_map = lambda w, wt, wr, wv, wf: (wt[w], 0)
    weight_map = lambda w, wt, wr, wv, wf: (wr[w], 0, 0, 0)

    msg = pl.pallas_call(
        rgcn_msg_kernel,
        out_shape=jax.ShapeDtypeStruct((e_pad, D), jnp.float32),
        grid_spec=pltpu.PrefetchScalarGridSpec(
            num_scalar_prefetch=4,
            grid=(n_w,),
            in_specs=[
                pl.BlockSpec((tile_e, D), edge_map),          # h_src
                pl.BlockSpec((tile_e, 1), edge_map),          # rel ids
                pl.BlockSpec((tile_e, 1), edge_map),          # norm
                pl.BlockSpec((1, nb, si, so), weight_map),    # relation weight
            ],
            out_specs=pl.BlockSpec((tile_e, D), edge_map),
        ),
        compiler_params=pltpu.CompilerParams(
            dimension_semantics=("arbitrary",),
            vmem_limit_bytes=32 * 1024 * 1024),
    )(work_tile, work_rel, work_valid, work_first,
      h_src, rel_col, norm_s, bdd_w.astype(jnp.bfloat16))

    # TODO(synk): the destination scatter-add (segment-sum by dst) stays in XLA;
    # an in-kernel dst-sorted segment sum is possible but not implemented here.
    tile_n = min(tile_n, _round_up(num_nodes, 8))
    n_pad = _round_up(num_nodes, tile_n)
    agg = jnp.zeros((n_pad, D), jnp.float32).at[dst_s].add(msg)
    h_pad = jnp.zeros((n_pad, D), jnp.bfloat16).at[:num_nodes].set(
        h.astype(jnp.bfloat16))

    out = pl.pallas_call(
        rgcn_combine_kernel,
        out_shape=jax.ShapeDtypeStruct((n_pad, D), jnp.float32),
        grid=(n_pad // tile_n,),
        in_specs=[
            pl.BlockSpec((tile_n, D), lambda i: (i, 0)),      # agg
            pl.BlockSpec((tile_n, D), lambda i: (i, 0)),      # h
            pl.BlockSpec((D, D), lambda i: (0, 0)),           # loop weight (resident)
            pl.BlockSpec((1, D), lambda i: (0, 0)),           # bias (resident)
        ],
        out_specs=pl.BlockSpec((tile_n, D), lambda i: (i, 0)),
        compiler_params=pltpu.CompilerParams(
            dimension_semantics=("parallel",),
            vmem_limit_bytes=32 * 1024 * 1024),
    )(agg, h_pad, loop_w.astype(jnp.bfloat16), bias.reshape(1, D))
    # activation=None for the (only) hidden layer; dropout p=0 is a no-op
    return out[:num_nodes]


def desc2vec_cnn(x_nlc, conv_ws, conv_bs, fc_w, fc_b, *, tile_b=64):
    """Desc2VecCNN forward.  x_nlc: (B, L, D) channels-last."""
    B, L, D = x_nlc.shape
    n_shift = max(WINDOW_SIZES)
    n_win = len(WINDOW_SIZES)

    # combined conv weight (n_shift*D, n_win*D): row-block k = shift k,
    # column-block j = window size WINDOW_SIZES[j] (zero rows for k >= ws)
    wcat = jnp.zeros((n_shift * D, n_win * D), jnp.float32)
    for j, ws in enumerate(WINDOW_SIZES):
        for k in range(ws):
            wcat = wcat.at[k * D:(k + 1) * D, j * D:(j + 1) * D].set(conv_ws[j][k])
    bcat = jnp.concatenate(conv_bs).reshape(1, n_win * D)

    tile_b = min(tile_b, B)
    b_pad = _round_up(B, tile_b)
    x_pad = jnp.zeros((b_pad, L, D), jnp.bfloat16).at[:B].set(
        x_nlc.astype(jnp.bfloat16))

    out = pl.pallas_call(
        desc_cnn_kernel,
        out_shape=jax.ShapeDtypeStruct((b_pad, D), jnp.float32),
        grid=(b_pad // tile_b,),
        in_specs=[
            pl.BlockSpec((tile_b, L, D), lambda i: (i, 0, 0)),       # word embeds
            pl.BlockSpec((n_shift * D, n_win * D), lambda i: (0, 0)),  # conv weights
            pl.BlockSpec((1, n_win * D), lambda i: (0, 0)),            # conv biases
            pl.BlockSpec((n_win * D, D), lambda i: (0, 0)),            # fc weight
            pl.BlockSpec((1, D), lambda i: (0, 0)),                    # fc bias
        ],
        out_specs=pl.BlockSpec((tile_b, D), lambda i: (i, 0)),
        compiler_params=pltpu.CompilerParams(
            dimension_semantics=("parallel",),
            vmem_limit_bytes=32 * 1024 * 1024),
    )(x_pad, wcat.astype(jnp.bfloat16), bcat,
      fc_w.astype(jnp.bfloat16), fc_b.reshape(1, D))
    return out[:B]


def drgcn_forward(params, src, dst, h_ids, rel, norm, desc_word_ids):
    # rgcnLayers[0]: EmbeddingLayer -> entity embedding lookup (gather glue)
    h = params["entity_emb"][jnp.squeeze(h_ids)]
    # rgcnLayers[1]: RelGraphConv 'bdd' (single hidden layer -> activation=None)
    h = rgcn_bdd_layer(h, src, dst, rel, norm, params["rgcn_w"],
                       params["rgcn_loop_w"], params["rgcn_bias"],
                       num_nodes=params["entity_emb"].shape[0])
    # dkrlLayers[0]: DescEmbeddingLayer -> word embedding lookup (padding_idx=0)
    x = params["word_emb"][desc_word_ids]                   # (Bd, L, D)
    # dkrlLayers[1]: Desc2VecCNN
    e_cnn_vec = desc2vec_cnn(x, params["conv_ws"], params["conv_bs"],
                             params["fc_w"], params["fc_b"])
    return h, e_cnn_vec


# ----------------------------------------------------------------------------
# Deterministic parameter init (synthetic; shapes match the PyTorch module)
# ----------------------------------------------------------------------------
def init_params(key, num_nodes, h_dim, num_rels, num_bases, word_num):
    ks = jax.random.split(key, 13)
    sub = h_dim // num_bases
    entity_emb = 0.1 * jax.random.normal(ks[0], (num_nodes, h_dim), jnp.float32)
    word_emb = 0.1 * jax.random.normal(ks[1], (word_num + 1, h_dim), jnp.float32)
    word_emb = word_emb.at[0].set(0.0)                      # padding_idx = 0
    rgcn_w = 0.1 * jax.random.normal(ks[2], (num_rels, num_bases, sub, sub), jnp.float32)
    rgcn_loop_w = 0.1 * jax.random.normal(ks[3], (h_dim, h_dim), jnp.float32)
    rgcn_bias = 0.1 * jax.random.normal(ks[4], (h_dim,), jnp.float32)
    conv_ws, conv_bs = [], []
    for i, ws in enumerate(WINDOW_SIZES):
        # stored as (kernel, in, out); PyTorch stores (out, in, kernel)
        conv_ws.append(0.1 * jax.random.normal(ks[5 + i], (ws, h_dim, h_dim), jnp.float32))
        conv_bs.append(0.1 * jax.random.normal(ks[8 + i], (h_dim,), jnp.float32))
    fc_w = 0.1 * jax.random.normal(ks[11], (h_dim * len(WINDOW_SIZES), h_dim), jnp.float32)
    fc_b = 0.1 * jax.random.normal(ks[12], (h_dim,), jnp.float32)
    return dict(entity_emb=entity_emb, word_emb=word_emb, rgcn_w=rgcn_w,
                rgcn_loop_w=rgcn_loop_w, rgcn_bias=rgcn_bias,
                conv_ws=conv_ws, conv_bs=conv_bs, fc_w=fc_w, fc_b=fc_b)


# ----------------------------------------------------------------------------
# Pure-JAX reference (f32) for a sanity check
# ----------------------------------------------------------------------------
def reference(params, src, dst, h_ids, rel, norm, desc_ids, num_nodes):
    h = params["entity_emb"][jnp.squeeze(h_ids)]
    R, nb, si, so = params["rgcn_w"].shape
    D = nb * si
    h_src = h[src].reshape(-1, nb, si)
    w_e = params["rgcn_w"][rel]
    msg = jnp.einsum("ebi,ebio->ebo", h_src, w_e).reshape(-1, D) * norm
    agg = jnp.zeros((num_nodes, D), jnp.float32).at[dst].add(msg)
    h_out = agg + h @ params["rgcn_loop_w"] + params["rgcn_bias"]

    x = params["word_emb"][desc_ids]
    pooled = []
    for i, ws in enumerate(WINDOW_SIZES):
        w, b = params["conv_ws"][i], params["conv_bs"][i]
        y = sum(jnp.einsum("bld,do->blo", jnp.roll(x, -k, axis=1), w[k])
                for k in range(ws)) + b
        pooled.append(jnp.max(jnp.maximum(y, 0.0), axis=1))
    feats = jnp.concatenate(pooled, axis=-1)
    vec = feats @ params["fc_w"] + params["fc_b"]
    return h_out, vec


# ----------------------------------------------------------------------------
if __name__ == "__main__":
    key = jax.random.PRNGKey(0)
    num_nodes, h_dim, num_rels, num_bases = 8, 32, 4, 4
    word_num, seq_len, desc_batch = 50, 16, 2    # sampledDescWordNumMax = seq_len
    num_edges = 16

    pkey, k1, k2, k3, k4 = jax.random.split(key, 5)
    params = init_params(pkey, num_nodes, h_dim, num_rels, num_bases, word_num)

    # TODO(synk): the DGL graph object `g` has no Pallas equivalent; it is
    # replaced by explicit (src, dst, rel, norm) edge arrays with the same math.
    src = jax.random.randint(k1, (num_edges,), 0, num_nodes)
    dst = jax.random.randint(k2, (num_edges,), 0, num_nodes)
    rel = jax.random.randint(k3, (num_edges,), 0, num_rels)
    norm = jnp.full((num_edges, 1), 0.5, jnp.float32)
    h_ids = jnp.arange(num_nodes, dtype=jnp.int32)[:, None]
    desc_ids = jax.random.randint(k4, (desc_batch, seq_len), 0, word_num + 1)

    fwd = jax.jit(drgcn_forward)
    h_out, desc_vec = fwd(params, src, dst, h_ids, rel, norm, desc_ids)
    jax.block_until_ready((h_out, desc_vec))

    h_ref, vec_ref = reference(params, src, dst, h_ids, rel, norm, desc_ids, num_nodes)
    assert h_out.shape == (num_nodes, h_dim) and desc_vec.shape == (desc_batch, h_dim)
    assert jnp.allclose(h_out, h_ref, rtol=1e-2, atol=1e-2)
    assert jnp.allclose(desc_vec, vec_ref, rtol=1e-2, atol=1e-2)
    print("KERNEL_OK")
</pallas_src>

<mosaic_0001>
module attributes {stable_mosaic.version = 11 : i64} {
  func.func @desc_cnn_kernel(%arg0: i32, %arg1: memref<2x16x32xbf16, #tpu.memory_space<vmem>>, %arg2: memref<96x96xbf16, #tpu.memory_space<vmem>>, %arg3: memref<1x96xf32, #tpu.memory_space<vmem>>, %arg4: memref<96x32xbf16, #tpu.memory_space<vmem>>, %arg5: memref<1x32xf32, #tpu.memory_space<vmem>>, %arg6: memref<2x32xf32, #tpu.memory_space<vmem>>) attributes {dimension_semantics = [#tpu.dimension_semantics<parallel>], iteration_bounds = array<i64: 1>, scalar_prefetch = 0 : i64, scratch_operands = 0 : i64, tpu.core_type = #tpu.core_type<tc>, window_params = [{transform_indices = @transform_0, window_bounds = array<i64: 2, 16, 32>}, {pipeline_mode = #tpu.pipeline_mode<synchronous>, transform_indices = @transform_1, window_bounds = array<i64: 96, 96>}, {pipeline_mode = #tpu.pipeline_mode<synchronous>, transform_indices = @transform_2, window_bounds = array<i64: 1, 96>}, {pipeline_mode = #tpu.pipeline_mode<synchronous>, transform_indices = @transform_3, window_bounds = array<i64: 96, 32>}, {pipeline_mode = #tpu.pipeline_mode<synchronous>, transform_indices = @transform_4, window_bounds = array<i64: 1, 32>}, {transform_indices = @transform_5, window_bounds = array<i64: 2, 32>}]} {
    %c0 = arith.constant 0 : index
    %c0_0 = arith.constant 0 : index
    %c0_1 = arith.constant 0 : index
    %0 = vector.load %arg1[%c0, %c0_0, %c0_1] : memref<2x16x32xbf16, #tpu.memory_space<vmem>>, vector<2x16x32xbf16>
    %1 = vector.extract_strided_slice %0 {offsets = [0, 1, 0], sizes = [2, 15, 32], strides = [1, 1, 1]} : vector<2x16x32xbf16> to vector<2x15x32xbf16>
    %2 = vector.extract_strided_slice %0 {offsets = [0, 0, 0], sizes = [2, 1, 32], strides = [1, 1, 1]} : vector<2x16x32xbf16> to vector<2x1x32xbf16>
    %3 = tpu.concatenate %1, %2 in 1 : vector<2x15x32xbf16>, vector<2x1x32xbf16> -> vector<2x16x32xbf16>
    %4 = vector.extract_strided_slice %0 {offsets = [0, 2, 0], sizes = [2, 14, 32], strides = [1, 1, 1]} : vector<2x16x32xbf16> to vector<2x14x32xbf16>
    %5 = vector.extract_strided_slice %0 {offsets = [0, 0, 0], sizes = [2, 2, 32], strides = [1, 1, 1]} : vector<2x16x32xbf16> to vector<2x2x32xbf16>
    %6 = tpu.concatenate %4, %5 in 1 : vector<2x14x32xbf16>, vector<2x2x32xbf16> -> vector<2x16x32xbf16>
    %7 = tpu.concatenate %0, %3, %6 in 2 : vector<2x16x32xbf16>, vector<2x16x32xbf16>, vector<2x16x32xbf16> -> vector<2x16x96xbf16>
    %8 = vector.shape_cast %7 : vector<2x16x96xbf16> to vector<32x96xbf16>
    %c0_2 = arith.constant 0 : index
    %c0_3 = arith.constant 0 : index
    %9 = vector.load %arg2[%c0_2, %c0_3] : memref<96x96xbf16, #tpu.memory_space<vmem>>, vector<96x96xbf16>
    %cst = arith.constant dense<0.000000e+00> : vector<32x96xf32>
    %10 = tpu.matmul %8, %9, %cst {dimension_numbers = #tpu.dot_dimension_numbers<[1], [0], [0], [1], [0, 0, 1, 1], [], []>} : vector<32x96xbf16>, vector<96x96xbf16>, vector<32x96xf32> -> vector<32x96xf32>
    %c0_4 = arith.constant 0 : index
    %c0_5 = arith.constant 0 : index
    %11 = vector.load %arg3[%c0_4, %c0_5] : memref<1x96xf32, #tpu.memory_space<vmem>>, vector<1x96xf32>
    %12 = vector.broadcast %11 : vector<1x96xf32> to vector<32x96xf32>
    %13 = arith.addf %10, %12 : vector<32x96xf32>
    %cst_6 = arith.constant 0.000000e+00 : f32
    %14 = vector.broadcast %cst_6 : f32 to vector<32x96xf32>
    %15 = arith.maximumf %13, %14 : vector<32x96xf32>
    %16 = vector.shape_cast %15 : vector<32x96xf32> to vector<2x16x96xf32>
    %cst_7 = arith.constant dense<0xFF800000> : vector<2x96xf32>
    %17 = vector.multi_reduction <maximumf>, %16, %cst_7 [1] : vector<2x16x96xf32> to vector<2x96xf32>
    %18 = arith.truncf %17 : vector<2x96xf32> to vector<2x96xbf16>
    %c0_8 = arith.constant 0 : index
    %c0_9 = arith.constant 0 : index
    %19 = vector.load %arg4[%c0_8, %c0_9] : memref<96x32xbf16, #tpu.memory_space<vmem>>, vector<96x32xbf16>
    %cst_10 = arith.constant dense<0.000000e+00> : vector<2x32xf32>
    %20 = tpu.matmul %18, %19, %cst_10 {dimension_numbers = #tpu.dot_dimension_numbers<[1], [0], [0], [1], [0, 0, 1, 1], [], []>} : vector<2x96xbf16>, vector<96x32xbf16>, vector<2x32xf32> -> vector<2x32xf32>
    %c0_11 = arith.constant 0 : index
    %c0_12 = arith.constant 0 : index
    %21 = vector.load %arg5[%c0_11, %c0_12] : memref<1x32xf32, #tpu.memory_space<vmem>>, vector<1x32xf32>
    %22 = vector.broadcast %21 : vector<1x32xf32> to vector<2x32xf32>
    %23 = arith.addf %20, %22 : vector<2x32xf32>
    %c0_13 = arith.constant 0 : index
    %c0_14 = arith.constant 0 : index
    %24 = vector.load %arg6[%c0_13, %c0_14] : memref<2x32xf32, #tpu.memory_space<vmem>>, vector<2x32xf32>
    tpu.vector_store %arg6[%c0_13, %c0_14], %23 {strides = array<i32>} : memref<2x32xf32, #tpu.memory_space<vmem>>, vector<2x32xf32>,
    return
  }
  func.func @transform_0(%arg0: i32) -> (i32, i32, i32) {
    %c0_i32 = arith.constant 0 : i32
    %c0_i32_0 = arith.constant 0 : i32
    %c0_i32_1 = arith.constant 0 : i32
    return %arg0, %c0_i32, %c0_i32_0 : i32, i32, i32
  }
  func.func @transform_1(%arg0: i32) -> (i32, i32) {
    %c0_i32 = arith.constant 0 : i32
    %c0_i32_0 = arith.constant 0 : i32
    %c0_i32_1 = arith.constant 0 : i32
    return %c0_i32, %c0_i32_0 : i32, i32
  }
  func.func @transform_2(%arg0: i32) -> (i32, i32) {
    %c0_i32 = arith.constant 0 : i32
    %c0_i32_0 = arith.constant 0 : i32
    %c0_i32_1 = arith.constant 0 : i32
    return %c0_i32, %c0_i32_0 : i32, i32
  }
  func.func @transform_3(%arg0: i32) -> (i32, i32) {
    %c0_i32 = arith.constant 0 : i32
    %c0_i32_0 = arith.constant 0 : i32
    %c0_i32_1 = arith.constant 0 : i32
    return %c0_i32, %c0_i32_0 : i32, i32
  }
  func.func @transform_4(%arg0: i32) -> (i32, i32) {
    %c0_i32 = arith.constant 0 : i32
    %c0_i32_0 = arith.constant 0 : i32
    %c0_i32_1 = arith.constant 0 : i32
    return %c0_i32, %c0_i32_0 : i32, i32
  }
  func.func @transform_5(%arg0: i32) -> (i32, i32) {
    %c0_i32 = arith.constant 0 : i32
    %c0_i32_0 = arith.constant 0 : i32
    return %arg0, %c0_i32 : i32, i32
  }
}

module attributes {stable_mosaic.version = 11 : i64} {
  func.func @rgcn_msg_kernel(%arg0: i32, %arg1: memref<4xi32, #tpu.memory_space<smem>>, %arg2: memref<4xi32, #tpu.memory_space<smem>>, %arg3: memref<4xi32, #tpu.memory_space<smem>>, %arg4: memref<4xi32, #tpu.memory_space<smem>>, %arg5: memref<16x32xbf16, #tpu.memory_space<vmem>>, %arg6: memref<16x1xi32, #tpu.memory_space<vmem>>, %arg7: memref<16x1xf32, #tpu.memory_space<vmem>>, %arg8: memref<1x4x8x8xbf16, #tpu.memory_space<vmem>>, %arg9: memref<16x32xf32, #tpu.memory_space<vmem>>) attributes {dimension_semantics = [#tpu.dimension_semantics<arbitrary>], iteration_bounds = array<i64: 4>, scalar_prefetch = 4 : i64, scratch_operands = 0 : i64, tpu.core_type = #tpu.core_type<tc>, window_params = [{transform_indices = @transform_0, window_bounds = array<i64: 16, 32>}, {transform_indices = @transform_1, window_bounds = array<i64: 16, 1>}, {transform_indices = @transform_2, window_bounds = array<i64: 16, 1>}, {transform_indices = @transform_3, window_bounds = array<i64: 1, 4, 8, 8>}, {transform_indices = @transform_4, window_bounds = array<i64: 16, 32>}]} {
    %0 = arith.index_cast %arg0 : i32 to index
    %1 = memref.load %arg2[%0] : memref<4xi32, #tpu.memory_space<smem>>
    %c0 = arith.constant 0 : index
    %c0_0 = arith.constant 0 : index
    %2 = vector.load %arg6[%c0, %c0_0] : memref<16x1xi32, #tpu.memory_space<vmem>>, vector<16x1xi32>
    %3 = vector.broadcast %1 : i32 to vector<16x1xi32>
    %4 = arith.cmpi eq, %2, %3 : vector<16x1xi32>
    %5 = arith.index_cast %arg0 : i32 to index
    %6 = memref.load %arg3[%5] : memref<4xi32, #tpu.memory_space<smem>>
    %c0_i32 = arith.constant 0 : i32
    %7 = arith.cmpi sgt, %6, %c0_i32 : i32
    %8 = vector.broadcast %7 : i1 to vector<16x1xi1>
    %9 = arith.andi %4, %8 : vector<16x1xi1>
    %c0_1 = arith.constant 0 : index
    %c0_2 = arith.constant 0 : index
    %10 = vector.load %arg7[%c0_1, %c0_2] : memref<16x1xf32, #tpu.memory_space<vmem>>, vector<16x1xf32>
    %cst = arith.constant 0.000000e+00 : f32
    %11 = vector.broadcast %cst : f32 to vector<16x1xf32>
    %12 = arith.select %9, %10, %11 : vector<16x1xi1>, vector<16x1xf32>
    %c0_3 = arith.constant 0 : index
    %c0_4 = arith.constant 0 : index
    %13 = vector.load %arg5[%c0_3, %c0_4] : memref<16x32xbf16, #tpu.memory_space<vmem>>, vector<16x32xbf16>
    %14 = vector.extract_strided_slice %13 {offsets = [0, 0], sizes = [16, 8], strides = [1, 1]} : vector<16x32xbf16> to vector<16x8xbf16>
    %c0_5 = arith.constant 0 : index
    %c0_6 = arith.constant 0 : index
    %c0_7 = arith.constant 0 : index
    %c0_8 = arith.constant 0 : index
    %15 = vector.load %arg8[%c0_5, %c0_6, %c0_7, %c0_8] : memref<1x4x8x8xbf16, #tpu.memory_space<vmem>>, vector<1x1x8x8xbf16>
    %16 = vector.shape_cast %15 : vector<1x1x8x8xbf16> to vector<8x8xbf16>
    %cst_9 = arith.constant dense<0.000000e+00> : vector<16x8xf32>
    %17 = tpu.matmul %14, %16, %cst_9 {dimension_numbers = #tpu.dot_dimension_numbers<[1], [0], [0], [1], [0, 0, 1, 1], [], []>} : vector<16x8xbf16>, vector<8x8xbf16>, vector<16x8xf32> -> vector<16x8xf32>
    %18 = vector.extract_strided_slice %13 {offsets = [0, 8], sizes = [16, 8], strides = [1, 1]} : vector<16x32xbf16> to vector<16x8xbf16>
    %c0_10 = arith.constant 0 : index
    %c1 = arith.constant 1 : index
    %c0_11 = arith.constant 0 : index
    %c0_12 = arith.constant 0 : index
    %19 = vector.load %arg8[%c0_10, %c1, %c0_11, %c0_12] : memref<1x4x8x8xbf16, #tpu.memory_space<vmem>>, vector<1x1x8x8xbf16>
    %20 = vector.shape_cast %19 : vector<1x1x8x8xbf16> to vector<8x8xbf16>
    %cst_13 = arith.constant dense<0.000000e+00> : vector<16x8xf32>
    %21 = tpu.matmul %18, %20, %cst_13 {dimension_numbers = #tpu.dot_dimension_numbers<[1], [0], [0], [1], [0, 0, 1, 1], [], []>} : vector<16x8xbf16>, vector<8x8xbf16>, vector<16x8xf32> -> vector<16x8xf32>
    %22 = vector.extract_strided_slice %13 {offsets = [0, 16], sizes = [16, 8], strides = [1, 1]} : vector<16x32xbf16> to vector<16x8xbf16>
    %c0_14 = arith.constant 0 : index
    %c2 = arith.constant 2 : index
    %c0_15 = arith.constant 0 : index
    %c0_16 = arith.constant 0 : index
    %23 = vector.load %arg8[%c0_14, %c2, %c0_15, %c0_16] : memref<1x4x8x8xbf16, #tpu.memory_space<vmem>>, vector<1x1x8x8xbf16>
    %24 = vector.shape_cast %23 : vector<1x1x8x8xbf16> to vector<8x8xbf16>
    %cst_17 = arith.constant dense<0.000000e+00> : vector<16x8xf32>
    %25 = tpu.matmul %22, %24, %cst_17 {dimension_numbers = #tpu.dot_dimension_numbers<[1], [0], [0], [1], [0, 0, 1, 1], [], []>} : vector<16x8xbf16>, vector<8x8xbf16>, vector<16x8xf32> -> vector<16x8xf32>
    %26 = vector.extract_strided_slice %13 {offsets = [0, 24], sizes = [16, 8], strides = [1, 1]} : vector<16x32xbf16> to vector<16x8xbf16>
    %c0_18 = arith.constant 0 : index
    %c3 = arith.constant 3 : index
    %c0_19 = arith.constant 0 : index
    %c0_20 = arith.constant 0 : index
    %27 = vector.load %arg8[%c0_18, %c3, %c0_19, %c0_20] : memref<1x4x8x8xbf16, #tpu.memory_space<vmem>>, vector<1x1x8x8xbf16>
    %28 = vector.shape_cast %27 : vector<1x1x8x8xbf16> to vector<8x8xbf16>
    %cst_21 = arith.constant dense<0.000000e+00> : vector<16x8xf32>
    %29 = tpu.matmul %26, %28, %cst_21 {dimension_numbers = #tpu.dot_dimension_numbers<[1], [0], [0], [1], [0, 0, 1, 1], [], []>} : vector<16x8xbf16>, vector<8x8xbf16>, vector<16x8xf32> -> vector<16x8xf32>
    %30 = tpu.concatenate %17, %21, %25, %29 in 1 : vector<16x8xf32>, vector<16x8xf32>, vector<16x8xf32>, vector<16x8xf32> -> vector<16x32xf32>
    %31 = vector.broadcast %12 : vector<16x1xf32> to vector<16x32xf32>
    %32 = arith.mulf %30, %31 : vector<16x32xf32>
    %33 = arith.index_cast %arg0 : i32 to index
    %34 = memref.load %arg4[%33] : memref<4xi32, #tpu.memory_space<smem>>
    %c1_i32 = arith.constant 1 : i32
    %35 = arith.cmpi eq, %34, %c1_i32 : i32
    %36 = arith.extui %35 : i1 to i32
    %c0_i32_22 = arith.constant 0 : i32
    %37 = arith.cmpi ne, %36, %c0_i32_22 : i32
    scf.if %37 {
      %cst_27 = arith.constant 0.000000e+00 : f32
      %41 = vector.broadcast %cst_27 : f32 to vector<16x32xf32>
      %c0_28 = arith.constant 0 : index
      %c0_29 = arith.constant 0 : index
      %42 = vector.load %arg9[%c0_28, %c0_29] : memref<16x32xf32, #tpu.memory_space<vmem>>, vector<16x32xf32>
      tpu.vector_store %arg9[%c0_28, %c0_29], %41 {strides = array<i32>} : memref<16x32xf32, #tpu.memory_space<vmem>>, vector<16x32xf32>,
    } else {
    }
    %c0_23 = arith.constant 0 : index
    %c0_24 = arith.constant 0 : index
    %38 = vector.load %arg9[%c0_23, %c0_24] : memref<16x32xf32, #tpu.memory_space<vmem>>, vector<16x32xf32>
    %39 = arith.addf %38, %32 : vector<16x32xf32>
    %c0_25 = arith.constant 0 : index
    %c0_26 = arith.constant 0 : index
    %40 = vector.load %arg9[%c0_25, %c0_26] : memref<16x32xf32, #tpu.memory_space<vmem>>, vector<16x32xf32>
    tpu.vector_store %arg9[%c0_25, %c0_26], %39 {strides = array<i32>} : memref<16x32xf32, #tpu.memory_space<vmem>>, vector<16x32xf32>,
    return
  }
  func.func @transform_0(%arg0: i32, %arg1: memref<4xi32, #tpu.memory_space<smem>>, %arg2: memref<4xi32, #tpu.memory_space<smem>>, %arg3: memref<4xi32, #tpu.memory_space<smem>>, %arg4: memref<4xi32, #tpu.memory_space<smem>>) -> (i32, i32) {
    %0 = arith.index_cast %arg0 : i32 to index
    %1 = memref.load %arg1[%0] : memref<4xi32, #tpu.memory_space<smem>>
    %c0_i32 = arith.constant 0 : i32
    %c0_i32_0 = arith.constant 0 : i32
    return %1, %c0_i32 : i32, i32
  }
  func.func @transform_1(%arg0: i32, %arg1: memref<4xi32, #tpu.memory_space<smem>>, %arg2: memref<4xi32, #tpu.memory_space<smem>>, %arg3: memref<4xi32, #tpu.memory_space<smem>>, %arg4: memref<4xi32, #tpu.memory_space<smem>>) -> (i32, i32) {
    %0 = arith.index_cast %arg0 : i32 to index
    %1 = memref.load %arg1[%0] : memref<4xi32, #tpu.memory_space<smem>>
    %c0_i32 = arith.constant 0 : i32
    %c0_i32_0 = arith.constant 0 : i32
    return %1, %c0_i32 : i32, i32
  }
  func.func @transform_2(%arg0: i32, %arg1: memref<4xi32, #tpu.memory_space<smem>>, %arg2: memref<4xi32, #tpu.memory_space<smem>>, %arg3: memref<4xi32, #tpu.memory_space<smem>>, %arg4: memref<4xi32, #tpu.memory_space<smem>>) -> (i32, i32) {
    %0 = arith.index_cast %arg0 : i32 to index
    %1 = memref.load %arg1[%0] : memref<4xi32, #tpu.memory_space<smem>>
    %c0_i32 = arith.constant 0 : i32
    %c0_i32_0 = arith.constant 0 : i32
    return %1, %c0_i32 : i32, i32
  }
  func.func @transform_3(%arg0: i32, %arg1: memref<4xi32, #tpu.memory_space<smem>>, %arg2: memref<4xi32, #tpu.memory_space<smem>>, %arg3: memref<4xi32, #tpu.memory_space<smem>>, %arg4: memref<4xi32, #tpu.memory_space<smem>>) -> (i32, i32, i32, i32) {
    %0 = arith.index_cast %arg0 : i32 to index
    %1 = memref.load %arg2[%0] : memref<4xi32, #tpu.memory_space<smem>>
    %c0_i32 = arith.constant 0 : i32
    %c0_i32_0 = arith.constant 0 : i32
    %c0_i32_1 = arith.constant 0 : i32
    %c0_i32_2 = arith.constant 0 : i32
    return %1, %c0_i32, %c0_i32_0, %c0_i32_1 : i32, i32, i32, i32
  }
  func.func @transform_4(%arg0: i32, %arg1: memref<4xi32, #tpu.memory_space<smem>>, %arg2: memref<4xi32, #tpu.memory_space<smem>>, %arg3: memref<4xi32, #tpu.memory_space<smem>>, %arg4: memref<4xi32, #tpu.memory_space<smem>>) -> (i32, i32) {
    %0 = arith.index_cast %arg0 : i32 to index
    %1 = memref.load %arg1[%0] : memref<4xi32, #tpu.memory_space<smem>>
    %c0_i32 = arith.constant 0 : i32
    %c0_i32_0 = arith.constant 0 : i32
    return %1, %c0_i32 : i32, i32
  }
}

module attributes {stable_mosaic.version = 11 : i64} {
  func.func @rgcn_combine_kernel(%arg0: i32, %arg1: memref<8x32xf32, #tpu.memory_space<vmem>>, %arg2: memref<8x32xbf16, #tpu.memory_space<vmem>>, %arg3: memref<32x32xbf16, #tpu.memory_space<vmem>>, %arg4: memref<1x32xf32, #tpu.memory_space<vmem>>, %arg5: memref<8x32xf32, #tpu.memory_space<vmem>>) attributes {dimension_semantics = [#tpu.dimension_semantics<parallel>], iteration_bounds = array<i64: 1>, scalar_prefetch = 0 : i64, scratch_operands = 0 : i64, tpu.core_type = #tpu.core_type<tc>, window_params = [{transform_indices = @transform_0, window_bounds = array<i64: 8, 32>}, {transform_indices = @transform_1, window_bounds = array<i64: 8, 32>}, {pipeline_mode = #tpu.pipeline_mode<synchronous>, transform_indices = @transform_2, window_bounds = array<i64: 32, 32>}, {pipeline_mode = #tpu.pipeline_mode<synchronous>, transform_indices = @transform_3, window_bounds = array<i64: 1, 32>}, {transform_indices = @transform_4, window_bounds = array<i64: 8, 32>}]} {
    %c0 = arith.constant 0 : index
    %c0_0 = arith.constant 0 : index
    %0 = vector.load %arg1[%c0, %c0_0] : memref<8x32xf32, #tpu.memory_space<vmem>>, vector<8x32xf32>
    %c0_1 = arith.constant 0 : index
    %c0_2 = arith.constant 0 : index
    %1 = vector.load %arg2[%c0_1, %c0_2] : memref<8x32xbf16, #tpu.memory_space<vmem>>, vector<8x32xbf16>
    %c0_3 = arith.constant 0 : index
    %c0_4 = arith.constant 0 : index
    %2 = vector.load %arg3[%c0_3, %c0_4] : memref<32x32xbf16, #tpu.memory_space<vmem>>, vector<32x32xbf16>
    %cst = arith.constant dense<0.000000e+00> : vector<8x32xf32>
    %3 = tpu.matmul %1, %2, %cst {dimension_numbers = #tpu.dot_dimension_numbers<[1], [0], [0], [1], [0, 0, 1, 1], [], []>} : vector<8x32xbf16>, vector<32x32xbf16>, vector<8x32xf32> -> vector<8x32xf32>
    %4 = arith.addf %0, %3 : vector<8x32xf32>
    %c0_5 = arith.constant 0 : index
    %c0_6 = arith.constant 0 : index
    %5 = vector.load %arg4[%c0_5, %c0_6] : memref<1x32xf32, #tpu.memory_space<vmem>>, vector<1x32xf32>
    %6 = vector.broadcast %5 : vector<1x32xf32> to vector<8x32xf32>
    %7 = arith.addf %4, %6 : vector<8x32xf32>
    %c0_7 = arith.constant 0 : index
    %c0_8 = arith.constant 0 : index
    %8 = vector.load %arg5[%c0_7, %c0_8] : memref<8x32xf32, #tpu.memory_space<vmem>>, vector<8x32xf32>
    tpu.vector_store %arg5[%c0_7, %c0_8], %7 {strides = array<i32>} : memref<8x32xf32, #tpu.memory_space<vmem>>, vector<8x32xf32>,
    return
  }
  func.func @transform_0(%arg0: i32) -> (i32, i32) {
    %c0_i32 = arith.constant 0 : i32
    %c0_i32_0 = arith.constant 0 : i32
    return %arg0, %c0_i32 : i32, i32
  }
  func.func @transform_1(%arg0: i32) -> (i32, i32) {
    %c0_i32 = arith.constant 0 : i32
    %c0_i32_0 = arith.constant 0 : i32
    return %arg0, %c0_i32 : i32, i32
  }
  func.func @transform_2(%arg0: i32) -> (i32, i32) {
    %c0_i32 = arith.constant 0 : i32
    %c0_i32_0 = arith.constant 0 : i32
    %c0_i32_1 = arith.constant 0 : i32
    return %c0_i32, %c0_i32_0 : i32, i32
  }
  func.func @transform_3(%arg0: i32) -> (i32, i32) {
    %c0_i32 = arith.constant 0 : i32
    %c0_i32_0 = arith.constant 0 : i32
    %c0_i32_1 = arith.constant 0 : i32
    return %c0_i32, %c0_i32_0 : i32, i32
  }
  func.func @transform_4(%arg0: i32) -> (i32, i32) {
    %c0_i32 = arith.constant 0 : i32
    %c0_i32_0 = arith.constant 0 : i32
    return %arg0, %c0_i32 : i32, i32
  }
}

</mosaic_0001>

<llo_original>
// kernel: drgcn_forward.5
$region0: #{drgcn_forward.5}
  #allocation0 [shape = 'u32[]', space=smem, size = 0x4, offset = 0x4, fixed_abs, tag = 'smem constant byte address 0x4 - core index']
  #allocation1 [shape = 'u32[72,128]{1,0:T(1,128)}', space=vmem, size = 0x9000, scoped, tag = 'internal scratch']
  %s0 = inlined_call_operand.vmem [shape: bf16[2,16,32], index: 0, kind: input, shape index: {}]
  %s1 = inlined_call_operand.vmem [shape: bf16[96,96], index: 1, kind: input, shape index: {}]
  %s2 = inlined_call_operand.vmem [shape: f32[1,96], index: 2, kind: input, shape index: {}]
  %s3 = inlined_call_operand.vmem [shape: bf16[96,32], index: 3, kind: input, shape index: {}]
  %s4 = inlined_call_operand.vmem [shape: f32[1,32], index: 4, kind: input, shape index: {}]
  %s5 = inlined_call_operand.hbm [shape: f32[2,32], index: 5, kind: output, shape index: {}]
  %s6 = sld [smem:[#allocation0]]
  $region30: #{drgcn_forward.5} parent=0
    _
  %s8 = ssub.s32 1, %s6
  %s9 = scalar_select 0, %s8, %s6
  $region1: #{drgcn_forward.5} parent=0
    #allocation2 [shape = 'u8[1024]{0}', space=vmem, size = 0x400, scoped, tag = 'output window, operand 0, single buffered']
    #allocation3 [shape = 's32[1]{0}', space=sflag, size = 0x4, scoped, tag = 'scoped memory for drgcn_forward.5']
    %10 = vsyncpa [#allocation3], 0
    // Predicated region
    $region2: #{drgcn_forward.5} parent=1 // pred_check
      _
    $region3: #{drgcn_forward.5} parent=1 // pred_check_branch
      %12 = sbr.rel (0) target = $region5
    $region4: #{drgcn_forward.5} parent=1 // pred_region
      _
    $region5: #{drgcn_forward.5} parent=1 // pred_fallthru
      _
    // Predicated region
    $region6: #{drgcn_forward.5} parent=1 // pred_check
      _
    $region7: #{drgcn_forward.5} parent=1 // pred_check_branch
      %14 = sbr.rel (0) target = $region9
    $region8: #{drgcn_forward.5} parent=1 // pred_region
      _
    $region9: #{drgcn_forward.5} parent=1 // pred_fallthru
      _
    // Predicated region
    $region10: #{drgcn_forward.5} parent=1 // pred_check
      _
    $region11: #{drgcn_forward.5} parent=1 // pred_check_branch
      %16 = sbr.rel (0) target = $region13
    $region12: #{drgcn_forward.5} parent=1 // pred_region
      _
    $region13: #{drgcn_forward.5} parent=1 // pred_fallthru
      _
    // Predicated region
    $region14: #{drgcn_forward.5} parent=1 // pred_check
      _
    $region15: #{drgcn_forward.5} parent=1 // pred_check_branch
      %18 = sbr.rel (0) target = $region17
    $region16: #{drgcn_forward.5} parent=1 // pred_region
      _
    $region17: #{drgcn_forward.5} parent=1 // pred_fallthru
      _
    // Predicated region
    $region18: #{drgcn_forward.5} parent=1 // pred_check
      _
    $region19: #{drgcn_forward.5} parent=1 // pred_check_branch
      %20 = sbr.rel (0) target = $region21
    $region20: #{drgcn_forward.5} parent=1 // pred_region
      _
    $region21: #{drgcn_forward.5} parent=1 // pred_fallthru
      _
    %v22 = vld [vmem:[%s0] sm:$0xf]
    %v23 = vld [vmem:[%s0 + $0x4] sm:$0xf]
    %v24 = vld [vmem:[%s0 + $0x8] sm:$0xf]
    %v25 = vld [vmem:[%s0 + $0xc] sm:$0xf]
    %v30 = vunpack.c.l.b16 %v22
    %v31 = vunpack.c.l.b16 %v23
    %v32 = vunpack.c.l.b16 %v24
    %v33 = vunpack.c.l.b16 %v25
    %v34 = vpack.c.b16 %v31, %v30
    %v35 = vpack.c.b16 %v33, %v32
    %v37 = vshrl.u32 %v34, 16
    %v39 = vshll.u32 %v34, 16
    %v41 = vrot.slane %v39, 1
    %v42 = vor.u32 %v37, %v41
    %v44 = vshrl.u32 %v35, 16
    %v46 = vshll.u32 %v35, 16
    %v48 = vrot.slane %v46, 1
    %v49 = vor.u32 %v44, %v48
    %v52 = vpack.c.b16 %v30, %v30
    %v53 = vpack.c.b16 %v32, %v32
    %v55 = vshll.u32 %v52, 16
    %v57 = vrot.slane %v55, 1
    %v59 = vshll.u32 %v53, 16
    %v61 = vrot.slane %v59, 1
    %vm64 = vcmask 1047552
    %vm65 = vsmask.f32 7424
    %vm66 = vmand %vm64, %vm65
    %v67 = vsel %vm66, %v42, %v57
    %v68 = vsel %vm66, %v49, %v61
    %v69 = vrot.slane %v34, 1
    %v70 = vrot.slane %v35, 1
    %v71 = vrot.slane %v52, 1
    %v72 = vrot.slane %v53, 1
    %vm73 = vcmask 1046528
    %v76 = vsel %vm73, %v69, %v71
    %v79 = vsel %vm73, %v70, %v72
    %82 = vrot.lane.b32.xlu0 %v67, 32
    %v83 = vpop.permute.xlu0 %82
    %84 = vrot.lane.b32.xlu0 %v68, 32
    %v85 = vpop.permute.xlu0 %84
    %88 = vrot.lane.b32.xlu0 %v76, 64
    %v89 = vpop.permute.xlu0 %88
    %90 = vrot.lane.b32.xlu0 %v79, 64
    %v91 = vpop.permute.xlu0 %90
    %vm92 = vcmask 261120
    %v94 = vsel %vm92, %v34, %v83
    %v96 = vsel %vm92, %v35, %v85
    %vm97 = vcmask 523264
    %v99 = vsel %vm97, %v94, %v89
    %v101 = vsel %vm97, %v96, %v91
    %v102 = vld [vmem:[%s1] sm:$0xf]
    %v103 = vld [vmem:[%s1 + $0x4] sm:$0xf]
    %v104 = vld [vmem:[%s1 + $0x8] sm:$0xf]
    %v105 = vld [vmem:[%s1 + $0xc] sm:$0xf]
    %v106 = vld [vmem:[%s1 + $0x10] sm:$0xf]
    %v107 = vld [vmem:[%s1 + $0x14] sm:$0xf]
    %v108 = vld [vmem:[%s1 + $0x18] sm:$0xf]
    %v109 = vld [vmem:[%s1 + $0x1c] sm:$0xf]
    %v110 = vld [vmem:[%s1 + $0x20] sm:$0xf]
    %v111 = vld [vmem:[%s1 + $0x24] sm:$0xf]
    %v112 = vld [vmem:[%s1 + $0x28] sm:$0xf]
    %v113 = vld [vmem:[%s1 + $0x2c] sm:$0xf]
    %v114 = vld [vmem:[%s2] sm:$0x1]
    %v116 = vperm.slane %v114, 0
    %v130 = vunpack.c.l.b16 %v102
    %v131 = vunpack.c.l.b16 %v103
    %v132 = vunpack.c.l.b16 %v104
    %v133 = vunpack.c.l.b16 %v105
    %v134 = vunpack.c.l.b16 %v106
    %v135 = vunpack.c.l.b16 %v107
    %v136 = vunpack.c.l.b16 %v108
    %v137 = vunpack.c.l.b16 %v109
    %v138 = vunpack.c.l.b16 %v110
    %v139 = vunpack.c.l.b16 %v111
    %v140 = vunpack.c.l.b16 %v112
    %v141 = vunpack.c.l.b16 %v113
    %v142 = vpack.c.b16 %v131, %v130
    %v143 = vpack.c.b16 %v133, %v132
    %v144 = vpack.c.b16 %v135, %v134
    %v145 = vpack.c.b16 %v137, %v136
    %v146 = vpack.c.b16 %v139, %v138
    %v147 = vpack.c.b16 %v141, %v140
    %vm154 = vcmask 785408
    %v155 = vsel %vm154, %v99, 0
    %v157 = vsel %vm154, %v101, 0
    %159 = vmatpush.bf16.msra.mxu0 0
    %160 = vmatpush.bf16.msra.mxu0 0
    %161 = vmatpush.bf16.msra.mxu0 %v147
    %162 = vmatpush.bf16.msra.mxu0 %v146
    %163 = vmatpush.bf16.msra.mxu0 %v145
    %164 = vmatpush.bf16.msra.mxu0 %v144
    %165 = vmatpush.bf16.msra.mxu0 %v143
    %166 = vmatpush.bf16.msra.mxu0 %v142
    %167 = vmatmul.bf16.gmra.mxu0 %v155
    %v168 = vpop.f32.mrf.mxu0
    %v169 = vadd.f32 %v116, %v168
    %v170 = vpop.f32.mrf.mxu0
    %v171 = vadd.f32 %v116, %v170
    %172 = vmatmul.bf16.gmra.mxu0 %v157
    %v173 = vpop.f32.mrf.mxu0
    %v174 = vadd.f32 %v116, %v173
    %v175 = vpop.f32.mrf.mxu0
    %v176 = vadd.f32 %v116, %v175
    %177 = vdwg.mxu0
    %v178 = vmax.f32 %v169, 0.0
    %v179 = vmax.f32 %v171, 0.0
    %v180 = vmax.f32 %v174, 0.0
    %v181 = vmax.f32 %v176, 0.0
    %v182 = vsel %vm154, %v178, -inf
    %v183 = vsel %vm154, %v179, -inf
    %v184 = vmax.f32 %v182, %v183
    %v185 = vrot.slane %v184, 4
    %v186 = vmax.f32 %v184, %v185
    %v187 = vrot.slane %v186, 2
    %v188 = vmax.f32 %v186, %v187
    %v189 = vrot.slane %v188, 1
    %v190 = vmax.f32 %v188, %v189
    %v191 = vsel %vm154, %v180, -inf
    %v192 = vsel %vm154, %v181, -inf
    %v193 = vmax.f32 %v191, %v192
    %v194 = vrot.slane %v193, 4
    %v195 = vmax.f32 %v193, %v194
    %v196 = vrot.slane %v195, 2
    %v197 = vmax.f32 %v195, %v196
    %v198 = vrot.slane %v197, 1
    %v199 = vmax.f32 %v197, %v198
    %v200 = vpack.c.bf16 %v190, %v190
    %v201 = vpack.c.bf16 %v199, %v199
    %v202 = vld [vmem:[%s3] sm:$0xf]
    %v203 = vld [vmem:[%s3 + $0x4] sm:$0xf]
    %v204 = vld [vmem:[%s3 + $0x8] sm:$0xf]
    %v205 = vld [vmem:[%s3 + $0xc] sm:$0xf]
    %v206 = vld [vmem:[%s3 + $0x10] sm:$0xf]
    %v207 = vld [vmem:[%s3 + $0x14] sm:$0xf]
    %v208 = vld [vmem:[%s3 + $0x18] sm:$0xf]
    %v209 = vld [vmem:[%s3 + $0x1c] sm:$0xf]
    %v210 = vld [vmem:[%s3 + $0x20] sm:$0xf]
    %v211 = vld [vmem:[%s3 + $0x24] sm:$0xf]
    %v212 = vld [vmem:[%s3 + $0x28] sm:$0xf]
    %v213 = vld [vmem:[%s3 + $0x2c] sm:$0xf]
    %v214 = vld [vmem:[%s4] sm:$0x1]
    %v216 = vperm.slane %v214, 0
    %v220 = vunpack.c.l.b16 %v200
    %v221 = vunpack.c.l.b16 %v201
    %vm222 = vcmask 1041409
    %v223 = vsel %vm222, %v221, %v220
    %v224 = vpack.c.b16 %v223, %v223
    %v237 = vunpack.c.l.b16 %v202
    %v238 = vunpack.c.l.b16 %v203
    %v239 = vunpack.c.l.b16 %v204
    %v240 = vunpack.c.l.b16 %v205
    %v241 = vunpack.c.l.b16 %v206
    %v242 = vunpack.c.l.b16 %v207
    %v243 = vunpack.c.l.b16 %v208
    %v244 = vunpack.c.l.b16 %v209
    %v245 = vunpack.c.l.b16 %v210
    %v246 = vunpack.c.l.b16 %v211
    %v247 = vunpack.c.l.b16 %v212
    %v248 = vunpack.c.l.b16 %v213
    %v249 = vpack.c.b16 %v238, %v237
    %v250 = vpack.c.b16 %v240, %v239
    %v251 = vpack.c.b16 %v242, %v241
    %v252 = vpack.c.b16 %v244, %v243
    %v253 = vpack.c.b16 %v246, %v245
    %v254 = vpack.c.b16 %v248, %v247
    %v262 = vsel %vm154, %v224, 0
    %264 = vmatpush.bf16.msra.mxu0 0
    %265 = vmatpush.bf16.msra.mxu0 0
    %266 = vmatpush.bf16.msra.mxu0 %v254
    %267 = vmatpush.bf16.msra.mxu0 %v253
    %268 = vmatpush.bf16.msra.mxu0 %v252
    %269 = vmatpush.bf16.msra.mxu0 %v251
    %270 = vmatpush.bf16.msra.mxu0 %v250
    %271 = vmatpush.bf16.msra.mxu0 %v249
    %272 = vmatmul.bf16.gmra.mxu0 %v262
    %v273 = vpop.f32.mrf.mxu0
    %v274 = vadd.f32 %v216, %v273
    %v275 = vpop.f32.mrf.mxu0
    %276 = vdwg.mxu0
    %vm277 = vcmask 254976
    %278 = vst.msk [vmem:[#allocation2] sm:$0x3] %vm277, %v274
    // Predicated region
    $region22: #{drgcn_forward.5} parent=1 // pred_check
      _
    $region23: #{drgcn_forward.5} parent=1 // pred_check_branch
      %280 = sbr.rel (0) target = $region25
    $region24: #{drgcn_forward.5} parent=1 // pred_region
      %282 = vsyncadd [#allocation3], 0
      %s284 = sshll.u32 [#allocation2], 4
      %s285 = int_to_ptr.vmem [resolvable:$true] %s284
      %s286 = sshll.u32 %s5, 4
      %s287 = int_to_ptr.hbm [resolvable:$true] %s286
      %289 = dma.vmem_to_hbm [thread:$0]  %s285, 32, %s287, [#allocation3]
    $region25: #{drgcn_forward.5} parent=1 // pred_fallthru
      _
    // Predicated region
    $region26: #{drgcn_forward.5} parent=1 // pred_check
      _
    $region27: #{drgcn_forward.5} parent=1 // pred_check_branch
      %291 = sbr.rel (0) target = $region29
    $region28: #{drgcn_forward.5} parent=1 // pred_region
      %293 = dma.done [#allocation3], 32
    $region29: #{drgcn_forward.5} parent=1 // pred_fallthru
      _
    %294 = vsyncpa [#allocation3], 1

// kernel: drgcn_forward.3
$region0: #{drgcn_forward.3}
  #allocation0 [shape = 'u32[]', space=smem, size = 0x4, offset = 0x4, fixed_abs, tag = 'smem constant byte address 0x4 - core index']
  #allocation1 [shape = 'u32[72,128]{1,0:T(1,128)}', space=vmem, size = 0x9000, scoped, tag = 'internal scratch']
  #allocation2 [shape = 's32[1]{0}', space=sflag, size = 0x4, scoped, tag = 'scoped memory for drgcn_forward.3']
  #allocation3 [shape = 'u8[512]{0}', space=smem, size = 0x200, scoped, tag = 'prefetched SMEM operand 0']
  #allocation4 [shape = 'u8[512]{0}', space=smem, size = 0x200, scoped, tag = 'prefetched SMEM operand 1']
  #allocation5 [shape = 'u8[512]{0}', space=smem, size = 0x200, scoped, tag = 'prefetched SMEM operand 2']
  #allocation6 [shape = 'u8[512]{0}', space=smem, size = 0x200, scoped, tag = 'prefetched SMEM operand 3']
  %s0 = inlined_call_operand.vmem [shape: s32[4], index: 0, kind: input, shape index: {}]
  %s1 = inlined_call_operand.vmem [shape: s32[4], index: 1, kind: input, shape index: {}]
  %s2 = inlined_call_operand.vmem [shape: s32[4], index: 2, kind: input, shape index: {}]
  %s3 = inlined_call_operand.vmem [shape: s32[4], index: 3, kind: input, shape index: {}]
  %s4 = inlined_call_operand.vmem [shape: bf16[16,32], index: 4, kind: input, shape index: {}]
  %s5 = inlined_call_operand.vmem [shape: s32[16,1], index: 5, kind: input, shape index: {}]
  %s6 = inlined_call_operand.vmem [shape: f32[16,1], index: 6, kind: input, shape index: {}]
  %s7 = inlined_call_operand.vmem [shape: bf16[4,4,8,8], index: 7, kind: input, shape index: {}]
  %s8 = inlined_call_operand.vmem [shape: f32[16,32], index: 8, kind: output, shape index: {}]
  %s9 = sld [smem:[#allocation0]]
  $region53: #{drgcn_forward.3} parent=0
    _
  %s11 = ssub.s32 1, %s9
  %s12 = scalar_select 0, %s11, %s9
  %s14 = sshll.u32 %s0, 4
  %s15 = int_to_ptr.vmem [resolvable:$true] %s14
  %17 = dma.vmem_to_smem %s15, 16, [#allocation3], [#allocation2]
  %s19 = sshll.u32 %s1, 4
  %s20 = int_to_ptr.vmem [resolvable:$true] %s19
  %22 = dma.vmem_to_smem %s20, 16, [#allocation4], [#allocation2]
  %s24 = sshll.u32 %s2, 4
  %s25 = int_to_ptr.vmem [resolvable:$true] %s24
  %27 = dma.vmem_to_smem %s25, 16, [#allocation5], [#allocation2]
  %s29 = sshll.u32 %s3, 4
  %s30 = int_to_ptr.vmem [resolvable:$true] %s29
  %32 = dma.vmem_to_smem %s30, 16, [#allocation6], [#allocation2]
  %34 = dma.done [#allocation2], 64
  %35 = sfence
  loop: start=0, step=1, limit=6
  $region2: #{drgcn_forward.3} parent=0 // loop_pre_header
    _
  $region3: #{drgcn_forward.3} parent=0 // loop_header
    %s37 = sphi 0, %s41
    %p38 = scmp.ge.s32.totalorder %s37, 6
    %s49 = sphi 0, %s51
    %s52 = sphi 0, %s49
    %s53 = sphi 0, %s52
    %s69 = sphi 0, %s53
    %s77 = sphi 0, %s79
    %s80 = sphi 0, %s77
    %s81 = sphi 0, %s80
    %s97 = sphi 0, %s81
    %s105 = sphi 0, %s107
    %s108 = sphi 0, %s105
    %s109 = sphi 0, %s108
    %s125 = sphi 0, %s109
    %s133 = sphi 0, %s135
    %s136 = sphi 0, %s133
    %s137 = sphi 0, %s136
    %s153 = sphi 0, %s137
    %s161 = sphi 0, %s163
    %s164 = sphi 0, %s161
    %s165 = sphi 0, %s164
    %s181 = sphi 0, %s165
  $region4: #{drgcn_forward.3} parent=0 // loop_header_branch
    %40 = sbr.rel (%p38) target = $region8
  $region5: #{drgcn_forward.3} parent=0 // loop_body
    %s42 = ssub.s32 %s37, 1
    %s43 = ssub.s32 %s37, 2
    %s44 = sadd.s32 %s37, 1
    %s45 = sld [smem:[#allocation3 + %s37]]
    %s46 = sld [smem:[#allocation3 + %s44]]
    %s47 = ssub.s32 %s45, %s46
    %p48 = scmp.eq.s32.totalorder %s47, 0
    %s50 = sadd.s32 %s49, 1
    %s51 = scalar_select %p48, %s49, %s50
    %p54 = pneg %p48
    %p55 = scmp.eq.s32.totalorder %s37, 3
    %p56 = por %p54, %p55
    %p57 = scmp.ne.s32.totalorder %s49, %s52
    %p58 = scmp.eq.s32.totalorder %s37, 0
    %p59 = por %p57, %p58
    %p60 = scmp.ne.s32.totalorder %s49, %s52
    %p61 = scmp.eq.s32.totalorder %s42, 3
    %p62 = por %p60, %p61
    %p63 = scmp.ne.s32.totalorder %s52, %s53
    %p64 = scmp.eq.s32.totalorder %s42, 0
    %p65 = por %p63, %p64
    %p66 = scmp.ne.s32.totalorder %s52, %s53
    %p67 = scmp.eq.s32.totalorder %s43, 3
    %p68 = por %p66, %p67
    %p70 = scmp.ne.s32.totalorder %s53, %s69
    %p71 = scmp.eq.s32.totalorder %s43, 0
    %p72 = por %p70, %p71
    %s73 = sld [smem:[#allocation3 + %s37]]
    %s74 = sld [smem:[#allocation3 + %s44]]
    %s75 = ssub.s32 %s73, %s74
    %p76 = scmp.eq.s32.totalorder %s75, 0
    %s78 = sadd.s32 %s77, 1
    %s79 = scalar_select %p76, %s77, %s78
    %p82 = pneg %p76
    %p83 = scmp.eq.s32.totalorder %s37, 3
    %p84 = por %p82, %p83
    %p85 = scmp.ne.s32.totalorder %s77, %s80
    %p86 = scmp.eq.s32.totalorder %s37, 0
    %p87 = por %p85, %p86
    %p88 = scmp.ne.s32.totalorder %s77, %s80
    %p89 = scmp.eq.s32.totalorder %s42, 3
    %p90 = por %p88, %p89
    %p91 = scmp.ne.s32.totalorder %s80, %s81
    %p92 = scmp.eq.s32.totalorder %s42, 0
    %p93 = por %p91, %p92
    %p94 = scmp.ne.s32.totalorder %s80, %s81
    %p95 = scmp.eq.s32.totalorder %s43, 3
    %p96 = por %p94, %p95
    %p98 = scmp.ne.s32.totalorder %s81, %s97
    %p99 = scmp.eq.s32.totalorder %s43, 0
    %p100 = por %p98, %p99
    %s101 = sld [smem:[#allocation3 + %s37]]
    %s102 = sld [smem:[#allocation3 + %s44]]
    %s103 = ssub.s32 %s101, %s102
    %p104 = scmp.eq.s32.totalorder %s103, 0
    %s106 = sadd.s32 %s105, 1
    %s107 = scalar_select %p104, %s105, %s106
    %p110 = pneg %p104
    %p111 = scmp.eq.s32.totalorder %s37, 3
    %p112 = por %p110, %p111
    %p113 = scmp.ne.s32.totalorder %s105, %s108
    %p114 = scmp.eq.s32.totalorder %s37, 0
    %p115 = por %p113, %p114
    %p116 = scmp.ne.s32.totalorder %s105, %s108
    %p117 = scmp.eq.s32.totalorder %s42, 3
    %p118 = por %p116, %p117
    %p119 = scmp.ne.s32.totalorder %s108, %s109
    %p120 = scmp.eq.s32.totalorder %s42, 0
    %p121 = por %p119, %p120
    %p122 = scmp.ne.s32.totalorder %s108, %s109
    %p123 = scmp.eq.s32.totalorder %s43, 3
    %p124 = por %p122, %p123
    %p126 = scmp.ne.s32.totalorder %s109, %s125
    %p127 = scmp.eq.s32.totalorder %s43, 0
    %p128 = por %p126, %p127
    %s129 = sld [smem:[#allocation4 + %s37]]
    %s130 = sld [smem:[#allocation4 + %s44]]
    %s131 = ssub.s32 %s129, %s130
    %p132 = scmp.eq.s32.totalorder %s131, 0
    %s134 = sadd.s32 %s133, 1
    %s135 = scalar_select %p132, %s133, %s134
    %p138 = pneg %p132
    %p139 = scmp.eq.s32.totalorder %s37, 3
    %p140 = por %p138, %p139
    %p141 = scmp.ne.s32.totalorder %s133, %s136
    %p142 = scmp.eq.s32.totalorder %s37, 0
    %p143 = por %p141, %p142
    %p144 = scmp.ne.s32.totalorder %s133, %s136
    %p145 = scmp.eq.s32.totalorder %s42, 3
    %p146 = por %p144, %p145
    %p147 = scmp.ne.s32.totalorder %s136, %s137
    %p148 = scmp.eq.s32.totalorder %s42, 0
    %p149 = por %p147, %p148
    %p150 = scmp.ne.s32.totalorder %s136, %s137
    %p151 = scmp.eq.s32.totalorder %s43, 3
    %p152 = por %p150, %p151
    %p154 = scmp.ne.s32.totalorder %s137, %s153
    %p155 = scmp.eq.s32.totalorder %s43, 0
    %p156 = por %p154, %p155
    %s157 = sld [smem:[#allocation3 + %s37]]
    %s158 = sld [smem:[#allocation3 + %s44]]
    %s159 = ssub.s32 %s157, %s158
    %p160 = scmp.eq.s32.totalorder %s159, 0
    %s162 = sadd.s32 %s161, 1
    %s163 = scalar_select %p160, %s161, %s162
    %p166 = pneg %p160
    %p167 = scmp.eq.s32.totalorder %s37, 3
    %p168 = por %p166, %p167
    %p169 = scmp.ne.s32.totalorder %s161, %s164
    %p170 = scmp.eq.s32.totalorder %s37, 0
    %p171 = por %p169, %p170
    %p172 = scmp.ne.s32.totalorder %s161, %s164
    %p173 = scmp.eq.s32.totalorder %s42, 3
    %p174 = por %p172, %p173
    %p175 = scmp.ne.s32.totalorder %s164, %s165
    %p176 = scmp.eq.s32.totalorder %s42, 0
    %p177 = por %p175, %p176
    %p178 = scmp.ne.s32.totalorder %s164, %s165
    %p179 = scmp.eq.s32.totalorder %s43, 3
    %p180 = por %p178, %p179
    %p182 = scmp.ne.s32.totalorder %s165, %s181
    %p183 = scmp.eq.s32.totalorder %s43, 0
    %p184 = por %p182, %p183
    %p185 = scmp.le.s32.totalorder 1, %s37
    %p186 = scmp.lt.s32.totalorder %s37, 5
    %p187 = pnand %p185, %p186
    %p188 = pneg %p187
    // Predicated region
    $region9: #{drgcn_forward.3} parent=5 // pred_check
      _
    $region10: #{drgcn_forward.3} parent=5 // pred_check_branch
      %190 = sbr.rel (%p187) target = $region12
    $region11: #{drgcn_forward.3} parent=5 // pred_region
      %s191 = ssub.s32 %s37, 1
    $region12: #{drgcn_forward.3} parent=5 // pred_fallthru
      _
    %p192 = scmp.lt.s32.totalorder %s37, 4
    // Predicated region
    $region13: #{drgcn_forward.3} parent=5 // pred_check
      %p193 = pneg %p192
    $region14: #{drgcn_forward.3} parent=5 // pred_check_branch
      %195 = sbr.rel (%p193) target = $region16
    $region15: #{drgcn_forward.3} parent=5 // pred_region
      // Predicated region
      $region17: #{drgcn_forward.3} parent=15 // pred_check
        %p196 = pneg %p59
      $region18: #{drgcn_forward.3} parent=15 // pred_check_branch
        %198 = sbr.rel (%p196) target = $region20
      $region19: #{drgcn_forward.3} parent=15 // pred_region
        %s199 = sld [smem:[#allocation3 + %s37]]
        %s200 = smul.u32 2, %s199
        %p201 = scmp.lt.s32.totalorder %s200, 1
        %s202 = scalar_select %p201, %s200, 1
        %s203 = smul.addr %s202, 4
        %s204 = scalar_lea.vmem %s4, %s203
        %s205 = sld [smem:[#allocation3 + %s37]]
        %s206 = smul.u32 2, %s205
      $region20: #{drgcn_forward.3} parent=15 // pred_fallthru
        _
      // Predicated region
      $region21: #{drgcn_forward.3} parent=15 // pred_check
        %p207 = pneg %p87
      $region22: #{drgcn_forward.3} parent=15 // pred_check_branch
        %209 = sbr.rel (%p207) target = $region24
      $region23: #{drgcn_forward.3} parent=15 // pred_region
        %s210 = sld [smem:[#allocation3 + %s37]]
        %s211 = smul.u32 2, %s210
        %p212 = scmp.lt.s32.totalorder %s211, 1
        %s213 = scalar_select %p212, %s211, 1
        %s214 = smul.addr %s213, 8
        %s215 = scalar_lea.vmem %s5, %s214
        %s216 = sld [smem:[#allocation3 + %s37]]
        %s217 = smul.u32 2, %s216
      $region24: #{drgcn_forward.3} parent=15 // pred_fallthru
        _
      // Predicated region
      $region25: #{drgcn_forward.3} parent=15 // pred_check
        %p218 = pneg %p115
      $region26: #{drgcn_forward.3} parent=15 // pred_check_branch
        %220 = sbr.rel (%p218) target = $region28
      $region27: #{drgcn_forward.3} parent=15 // pred_region
        %s221 = sld [smem:[#allocation3 + %s37]]
        %s222 = smul.u32 2, %s221
        %p223 = scmp.lt.s32.totalorder %s222, 1
        %s224 = scalar_select %p223, %s222, 1
        %s225 = smul.addr %s224, 8
        %s226 = scalar_lea.vmem %s6, %s225
        %s227 = sld [smem:[#allocation3 + %s37]]
        %s228 = smul.u32 2, %s227
      $region28: #{drgcn_forward.3} parent=15 // pred_fallthru
        _
      // Predicated region
      $region29: #{drgcn_forward.3} parent=15 // pred_check
        %p229 = pneg %p143
      $region30: #{drgcn_forward.3} parent=15 // pred_check_branch
        %231 = sbr.rel (%p229) target = $region32
      $region31: #{drgcn_forward.3} parent=15 // pred_region
        %s232 = sld [smem:[#allocation4 + %s37]]
        %p233 = scmp.lt.s32.totalorder %s232, 3
        %s234 = scalar_select %p233, %s232, 3
        %s235 = smul.addr %s234, 4
        %s236 = smul.addr %s235, 4
        %s237 = scalar_lea.vmem %s7, %s236
        %s238 = sld [smem:[#allocation4 + %s37]]
      $region32: #{drgcn_forward.3} parent=15 // pred_fallthru
        _
    $region16: #{drgcn_forward.3} parent=5 // pred_fallthru
      _
    %p239 = scmp.le.s32.totalorder 1, %s37
    %p240 = scmp.lt.s32.totalorder %s37, 5
    %p241 = pnand %p239, %p240
    %p242 = pneg %p241
    // Predicated region
    $region33: #{drgcn_forward.3} parent=5 // pred_check
      _
    $region34: #{drgcn_forward.3} parent=5 // pred_check_branch
      %244 = sbr.rel (%p241) target = $region36
    $region35: #{drgcn_forward.3} parent=5 // pred_region
      %s245 = ssub.s32 %s37, 1
      %s246 = sld [smem:[#allocation3 + %s42]]
      %s247 = smul.u32 2, %s246
      %p248 = scmp.lt.s32.totalorder %s247, 1
      %s249 = scalar_select %p248, %s247, 1
      %s250 = smul.addr %s249, 4
      %s251 = scalar_lea.vmem %s4, %s250
      %p252 = pneg %p65
      %p253 = pneg %p62
      %s254 = sld [smem:[#allocation3 + %s42]]
      %s255 = smul.u32 2, %s254
      %p256 = scmp.lt.s32.totalorder %s255, 1
      %s257 = scalar_select %p256, %s255, 1
      %s258 = smul.addr %s257, 8
      %s259 = scalar_lea.vmem %s5, %s258
      %p260 = pneg %p93
      %p261 = pneg %p90
      %s262 = sld [smem:[#allocation3 + %s42]]
      %s263 = smul.u32 2, %s262
      %p264 = scmp.lt.s32.totalorder %s263, 1
      %s265 = scalar_select %p264, %s263, 1
      %s266 = smul.addr %s265, 8
      %s267 = scalar_lea.vmem %s6, %s266
      %p268 = pneg %p121
      %p269 = pneg %p118
      %s270 = sld [smem:[#allocation4 + %s42]]
      %p271 = scmp.lt.s32.totalorder %s270, 3
      %s272 = scalar_select %p271, %s270, 3
      %s273 = smul.addr %s272, 4
      %s274 = smul.addr %s273, 4
      %s275 = scalar_lea.vmem %s7, %s274
      %p276 = pneg %p149
      %p277 = pneg %p146
      %p278 = pneg %p177
      %p279 = pneg %p174
      %s280 = sld [smem:[#allocation3 + %s42]]
      %s281 = smul.u32 2, %s280
      %p282 = scmp.lt.s32.totalorder %s281, 1
      %s283 = scalar_select %p282, %s281, 1
      %s284 = smul.addr %s283, 8
      %s285 = scalar_lea.vmem %s8, %s284
      %s286 = sld [smem:[#allocation3 + %s42]]
      %s287 = smul.u32 2, %s286
      %p288 = scmp.lt.s32.totalorder %s287, 1
      %s289 = scalar_select %p288, %s287, 1
      %s290 = smul.addr %s289, 4
      %s291 = scalar_lea.vmem %s4, %s290
      %s292 = sld [smem:[#allocation3 + %s42]]
      %s293 = smul.u32 2, %s292
      %s294 = sld [smem:[#allocation3 + %s42]]
      %s295 = smul.u32 2, %s294
      %p296 = scmp.lt.s32.totalorder %s295, 1
      %s297 = scalar_select %p296, %s295, 1
      %s298 = smul.addr %s297, 8
      %s299 = scalar_lea.vmem %s5, %s298
      %s300 = sld [smem:[#allocation3 + %s42]]
      %s301 = smul.u32 2, %s300
      %s302 = sld [smem:[#allocation3 + %s42]]
      %s303 = smul.u32 2, %s302
      %p304 = scmp.lt.s32.totalorder %s303, 1
      %s305 = scalar_select %p304, %s303, 1
      %s306 = smul.addr %s305, 8
      %s307 = scalar_lea.vmem %s6, %s306
      %s308 = sld [smem:[#allocation3 + %s42]]
      %s309 = smul.u32 2, %s308
      %s310 = sld [smem:[#allocation4 + %s42]]
      %p311 = scmp.lt.s32.totalorder %s310, 3
      %s312 = scalar_select %p311, %s310, 3
      %s313 = smul.addr %s312, 4
      %s314 = smul.addr %s313, 4
      %s315 = scalar_lea.vmem %s7, %s314
      %s316 = sld [smem:[#allocation4 + %s42]]
      %s317 = sld [smem:[#allocation3 + %s42]]
      %s318 = smul.u32 2, %s317
      %p319 = scmp.lt.s32.totalorder %s318, 1
      %s320 = scalar_select %p319, %s318, 1
      %s321 = smul.addr %s320, 8
      %s322 = scalar_lea.vmem %s8, %s321
      %s323 = sld [smem:[#allocation3 + %s42]]
      %s324 = smul.u32 2, %s323
      %s326 = sld [smem:[#allocation4 + %s42]]
      %v327 = vld [vmem:[%s299] sm:$0xff]
      %v328 = vld [vmem:[%s299 + $0x8] sm:$0xff]
      %v329 = vstv %s326
      %vm330 = vcmp.eq.s32.totalorder %v327, %v329
      %vm331 = vcmp.eq.s32.totalorder %v328, %v329
      %s332 = sld [smem:[#allocation5 + %s42]]
      %p333 = scmp.gt.s32.totalorder %s332, 0
      %s334 = scalar_select %p333, 1, 0
      %v335 = vstv %s334
      %vm336 = vcmp.eq.s32.totalorder %v335, 1
      %vm337 = vmand %vm330, %vm336
      %vm338 = vmand %vm331, %vm336
      %v339 = vld [vmem:[%s307] sm:$0xff]
      %v340 = vld [vmem:[%s307 + $0x8] sm:$0xff]
      %v341 = vsel %vm337, %v339, 0.0
      %v342 = vsel %vm338, %v340, 0.0
      %v343 = vld [vmem:[%s291] sm:$0xf]
      %v344 = vld [vmem:[%s291 + $0x4] sm:$0xf]
      %v345 = vld [vmem:[%s315] sm:$0xf]
      %v348 = vunpack.c.l.b16 %v343
      %v349 = vunpack.c.l.b16 %v344
      %v350 = vpack.c.b16 %v349, %v348
      %vm351 = vcmask 64512
      %v353 = vsel %vm351, %v350, 0
      %vm355 = vcmask 1043456
      %v357 = vsel %vm355, %v345, 0
      %359 = vmatpush.bf16.msra.mxu0 0
      %360 = vmatpush.bf16.msra.mxu0 0
      %361 = vmatpush.bf16.msra.mxu0 0
      %362 = vmatpush.bf16.msra.mxu0 0
      %363 = vmatpush.bf16.msra.mxu0 0
      %364 = vmatpush.bf16.msra.mxu0 0
      %365 = vmatpush.bf16.msra.mxu0 0
      %366 = vmatpush.bf16.msra.mxu0 %v357
      %367 = vmatmul.bf16.gmra.mxu0 %v353
      %v368 = vpop.f32.mrf.mxu0
      %v369 = vadd.f32 0.0, %v368
      %v370 = vpop.f32.mrf.mxu0
      %v371 = vadd.f32 0.0, %v370
      %372 = vdwg.mxu0
      %s373 = scalar_lea.vmem %s315, 4
      %v374 = vld [vmem:[%s373] sm:$0xf]
      %375 = vrot.lane.b32.xlu0 %v350, 120
      %v376 = vpop.permute.xlu0 %375
      %v378 = vsel %vm351, %v376, 0
      %v381 = vsel %vm355, %v374, 0
      %383 = vmatpush.bf16.msra.mxu0 0
      %384 = vmatpush.bf16.msra.mxu0 0
      %385 = vmatpush.bf16.msra.mxu0 0
      %386 = vmatpush.bf16.msra.mxu0 0
      %387 = vmatpush.bf16.msra.mxu0 0
      %388 = vmatpush.bf16.msra.mxu0 0
      %389 = vmatpush.bf16.msra.mxu0 0
      %390 = vmatpush.bf16.msra.mxu0 %v381
      %391 = vmatmul.bf16.gmra.mxu0 %v378
      %v392 = vpop.f32.mrf.mxu0
      %v393 = vadd.f32 0.0, %v392
      %v394 = vpop.f32.mrf.mxu0
      %v395 = vadd.f32 0.0, %v394
      %396 = vdwg.mxu0
      %s397 = scalar_lea.vmem %s315, 8
      %v398 = vld [vmem:[%s397] sm:$0xf]
      %399 = vrot.lane.b32.xlu0 %v350, 112
      %v400 = vpop.permute.xlu0 %399
      %v402 = vsel %vm351, %v400, 0
      %v405 = vsel %vm355, %v398, 0
      %407 = vmatpush.bf16.msra.mxu0 0
      %408 = vmatpush.bf16.msra.mxu0 0
      %409 = vmatpush.bf16.msra.mxu0 0
      %410 = vmatpush.bf16.msra.mxu0 0
      %411 = vmatpush.bf16.msra.mxu0 0
      %412 = vmatpush.bf16.msra.mxu0 0
      %413 = vmatpush.bf16.msra.mxu0 0
      %414 = vmatpush.bf16.msra.mxu0 %v405
      %415 = vmatmul.bf16.gmra.mxu0 %v402
      %v416 = vpop.f32.mrf.mxu0
      %v417 = vadd.f32 0.0, %v416
      %v418 = vpop.f32.mrf.mxu0
      %v419 = vadd.f32 0.0, %v418
      %420 = vdwg.mxu0
      %s421 = scalar_lea.vmem %s315, 12
      %v422 = vld [vmem:[%s421] sm:$0xf]
      %423 = vrot.lane.b32.xlu0 %v350, 104
      %v424 = vpop.permute.xlu0 %423
      %v426 = vsel %vm351, %v424, 0
      %v429 = vsel %vm355, %v422, 0
      %431 = vmatpush.bf16.msra.mxu0 0
      %432 = vmatpush.bf16.msra.mxu0 0
      %433 = vmatpush.bf16.msra.mxu0 0
      %434 = vmatpush.bf16.msra.mxu0 0
      %435 = vmatpush.bf16.msra.mxu0 0
      %436 = vmatpush.bf16.msra.mxu0 0
      %437 = vmatpush.bf16.msra.mxu0 0
      %438 = vmatpush.bf16.msra.mxu0 %v429
      %439 = vmatmul.bf16.gmra.mxu0 %v426
      %v440 = vpop.f32.mrf.mxu0
      %v441 = vadd.f32 0.0, %v440
      %v442 = vpop.f32.mrf.mxu0
      %v443 = vadd.f32 0.0, %v442
      %444 = vdwg.mxu0
      %447 = vrot.lane.b32.xlu0 %v393, 8
      %v448 = vpop.permute.xlu0 %447
      %449 = vrot.lane.b32.xlu0 %v395, 8
      %v450 = vpop.permute.xlu0 %449
      %455 = vrot.lane.b32.xlu0 %v417, 16
      %v456 = vpop.permute.xlu0 %455
      %457 = vrot.lane.b32.xlu0 %v419, 16
      %v458 = vpop.permute.xlu0 %457
      %463 = vrot.lane.b32.xlu0 %v441, 24
      %v464 = vpop.permute.xlu0 %463
      %465 = vrot.lane.b32.xlu0 %v443, 24
      %v466 = vpop.permute.xlu0 %465
      %v469 = vsel %vm351, %v369, %v448
      %v470 = vsel %vm351, %v371, %v450
      %vm471 = vcmask 130048
      %v472 = vsel %vm471, %v469, %v456
      %v473 = vsel %vm471, %v470, %v458
      %vm474 = vcmask 195584
      %v475 = vsel %vm474, %v472, %v464
      %v476 = vsel %vm474, %v473, %v466
      %478 = vset.pattern.permute.xlu0 0
      %479 = vperm.xlu0 %478, %v341
      %v480 = vpop.permute.xlu0 %479
      %483 = vset.pattern.permute.xlu0 0
      %484 = vperm.xlu0 %483, %v342
      %v485 = vpop.permute.xlu0 %484
      %v487 = vmul.f32 %v475, %v480
      %v488 = vmul.f32 %v476, %v485
      %s489 = sld [smem:[#allocation6 + %s42]]
      %p490 = scmp.eq.s32.totalorder %s489, 1
      // Predicated region
      $region37: #{drgcn_forward.3} parent=35 // pred_check
        %p491 = pneg %p490
      $region38: #{drgcn_forward.3} parent=35 // pred_check_branch
        %493 = sbr.rel (%p491) target = $region40
      $region39: #{drgcn_forward.3} parent=35 // pred_region
        %vm494 = vcmask 261120
        %495 = vst.msk [vmem:[%s322] sm:$0xff] %vm494, 0.0
        %496 = vst.msk [vmem:[%s322 + $0x8] sm:$0xff] %vm494, 0.0
      $region40: #{drgcn_forward.3} parent=35 // pred_fallthru
        _
      %v497 = vld [vmem:[%s322] sm:$0xff]
      %v498 = vld [vmem:[%s322 + $0x8] sm:$0xff]
      %v499 = vadd.f32 %v497, %v487
      %v500 = vadd.f32 %v498, %v488
      %vm501 = vcmask 261120
      %502 = vst.msk [vmem:[%s322] sm:$0xff] %vm501, %v499
      %503 = vst.msk [vmem:[%s322 + $0x8] sm:$0xff] %vm501, %v500
      %s504 = sld [smem:[#allocation3 + %s42]]
      %s505 = smul.u32 2, %s504
      %p506 = scmp.lt.s32.totalorder %s505, 1
      %s507 = scalar_select %p506, %s505, 1
      %s508 = smul.addr %s507, 8
      %s509 = scalar_lea.vmem %s8, %s508
      // Predicated region
      $region41: #{drgcn_forward.3} parent=35 // pred_check
        %p510 = pneg %p174
      $region42: #{drgcn_forward.3} parent=35 // pred_check_branch
        %512 = sbr.rel (%p510) target = $region44
      $region43: #{drgcn_forward.3} parent=35 // pred_region
        %s513 = sld [smem:[#allocation3 + %s42]]
        %s514 = smul.u32 2, %s513
      $region44: #{drgcn_forward.3} parent=35 // pred_fallthru
        _
    $region36: #{drgcn_forward.3} parent=5 // pred_fallthru
      _
    %p515 = scmp.le.s32.totalorder 2, %s37
    // Predicated region
    $region45: #{drgcn_forward.3} parent=5 // pred_check
      %p516 = pneg %p515
    $region46: #{drgcn_forward.3} parent=5 // pred_check_branch
      %518 = sbr.rel (%p516) target = $region48
    $region47: #{drgcn_forward.3} parent=5 // pred_region
      %s519 = ssub.s32 %s37, 2
      // Predicated region
      $region49: #{drgcn_forward.3} parent=47 // pred_check
        %p520 = pneg %p180
      $region50: #{drgcn_forward.3} parent=47 // pred_check_branch
        %522 = sbr.rel (%p520) target = $region52
      $region51: #{drgcn_forward.3} parent=47 // pred_region
        %s523 = sld [smem:[#allocation3 + %s43]]
        %s524 = smul.u32 2, %s523
        %p525 = scmp.lt.s32.totalorder %s524, 1
        %s526 = scalar_select %p525, %s524, 1
        %s527 = smul.addr %s526, 8
        %s528 = scalar_lea.vmem %s8, %s527
      $region52: #{drgcn_forward.3} parent=47 // pred_fallthru
        _
    $region48: #{drgcn_forward.3} parent=5 // pred_fallthru
      _
  $region6: #{drgcn_forward.3} parent=0 // loop_footer
    %s41 = sadd.s32 1, %s37
  $region7: #{drgcn_forward.3} parent=0 // loop_footer_branch
    %36 = sbr.rel target = $region3
  $region8: #{drgcn_forward.3} parent=0 // loop_exit
    _

// kernel: drgcn_forward.4
$region0: #{drgcn_forward.4}
  #allocation0 [shape = 'u32[]', space=smem, size = 0x4, offset = 0x4, fixed_abs, tag = 'smem constant byte address 0x4 - core index']
  #allocation1 [shape = 'u32[72,128]{1,0:T(1,128)}', space=vmem, size = 0x9000, scoped, tag = 'internal scratch']
  %s0 = inlined_call_operand.vmem [shape: f32[8,32], index: 0, kind: input, shape index: {}]
  %s1 = inlined_call_operand.vmem [shape: bf16[8,32], index: 1, kind: input, shape index: {}]
  %s2 = inlined_call_operand.vmem [shape: bf16[32,32], index: 2, kind: input, shape index: {}]
  %s3 = inlined_call_operand.vmem [shape: f32[1,32], index: 3, kind: input, shape index: {}]
  %s4 = inlined_call_operand.hbm [shape: f32[8,32], index: 4, kind: output, shape index: {}]
  %s5 = sld [smem:[#allocation0]]
  $region26: #{drgcn_forward.4} parent=0
    _
  %s7 = ssub.s32 1, %s5
  %s8 = scalar_select 0, %s7, %s5
  $region1: #{drgcn_forward.4} parent=0
    #allocation2 [shape = 'u8[4096]{0}', space=vmem, size = 0x1000, scoped, tag = 'output window, operand 0, single buffered']
    #allocation3 [shape = 's32[1]{0}', space=sflag, size = 0x4, scoped, tag = 'scoped memory for drgcn_forward.4']
    %9 = vsyncpa [#allocation3], 0
    // Predicated region
    $region2: #{drgcn_forward.4} parent=1 // pred_check
      _
    $region3: #{drgcn_forward.4} parent=1 // pred_check_branch
      %11 = sbr.rel (0) target = $region5
    $region4: #{drgcn_forward.4} parent=1 // pred_region
      _
    $region5: #{drgcn_forward.4} parent=1 // pred_fallthru
      _
    // Predicated region
    $region6: #{drgcn_forward.4} parent=1 // pred_check
      _
    $region7: #{drgcn_forward.4} parent=1 // pred_check_branch
      %13 = sbr.rel (0) target = $region9
    $region8: #{drgcn_forward.4} parent=1 // pred_region
      _
    $region9: #{drgcn_forward.4} parent=1 // pred_fallthru
      _
    // Predicated region
    $region10: #{drgcn_forward.4} parent=1 // pred_check
      _
    $region11: #{drgcn_forward.4} parent=1 // pred_check_branch
      %15 = sbr.rel (0) target = $region13
    $region12: #{drgcn_forward.4} parent=1 // pred_region
      _
    $region13: #{drgcn_forward.4} parent=1 // pred_fallthru
      _
    // Predicated region
    $region14: #{drgcn_forward.4} parent=1 // pred_check
      _
    $region15: #{drgcn_forward.4} parent=1 // pred_check_branch
      %17 = sbr.rel (0) target = $region17
    $region16: #{drgcn_forward.4} parent=1 // pred_region
      _
    $region17: #{drgcn_forward.4} parent=1 // pred_fallthru
      _
    %v19 = vld [vmem:[%s0] sm:$0xff]
    %v20 = vld [vmem:[%s1] sm:$0xf]
    %v21 = vld [vmem:[%s2] sm:$0xf]
    %v22 = vld [vmem:[%s2 + $0x4] sm:$0xf]
    %v23 = vld [vmem:[%s2 + $0x8] sm:$0xf]
    %v24 = vld [vmem:[%s2 + $0xc] sm:$0xf]
    %v29 = vunpack.c.l.b16 %v21
    %v30 = vunpack.c.l.b16 %v22
    %v31 = vunpack.c.l.b16 %v23
    %v32 = vunpack.c.l.b16 %v24
    %v33 = vpack.c.b16 %v30, %v29
    %v34 = vpack.c.b16 %v32, %v31
    %vm37 = vcmask 261120
    %v39 = vsel %vm37, %v20, 0
    %41 = vmatpush.bf16.msra.mxu0 0
    %42 = vmatpush.bf16.msra.mxu0 0
    %43 = vmatpush.bf16.msra.mxu0 0
    %44 = vmatpush.bf16.msra.mxu0 0
    %45 = vmatpush.bf16.msra.mxu0 0
    %46 = vmatpush.bf16.msra.mxu0 0
    %47 = vmatpush.bf16.msra.mxu0 %v34
    %48 = vmatpush.bf16.msra.mxu0 %v33
    %49 = vmatmul.bf16.gmra.mxu0 %v39
    %v50 = vpop.f32.mrf.mxu0
    %v51 = vadd.f32 0.0, %v50
    %v52 = vpop.f32.mrf.mxu0
    %53 = vdwg.mxu0
    %v54 = vadd.f32 %v19, %v51
    %v55 = vld [vmem:[%s3] sm:$0x1]
    %v57 = vperm.slane %v55, 0
    %v59 = vadd.f32 %v54, %v57
    %60 = vst.msk [vmem:[#allocation2] sm:$0xff] %vm37, %v59
    // Predicated region
    $region18: #{drgcn_forward.4} parent=1 // pred_check
      _
    $region19: #{drgcn_forward.4} parent=1 // pred_check_branch
      %62 = sbr.rel (0) target = $region21
    $region20: #{drgcn_forward.4} parent=1 // pred_region
      %64 = vsyncadd [#allocation3], 0
      %s66 = sshll.u32 [#allocation2], 4
      %s67 = int_to_ptr.vmem [resolvable:$true] %s66
      %s68 = sshll.u32 %s4, 4
      %s69 = int_to_ptr.hbm [resolvable:$true] %s68
      %71 = dma.vmem_to_hbm [thread:$0]  %s67, 128, %s69, [#allocation3]
    $region21: #{drgcn_forward.4} parent=1 // pred_fallthru
      _
    // Predicated region
    $region22: #{drgcn_forward.4} parent=1 // pred_check
      _
    $region23: #{drgcn_forward.4} parent=1 // pred_check_branch
      %73 = sbr.rel (0) target = $region25
    $region24: #{drgcn_forward.4} parent=1 // pred_region
      %75 = dma.done [#allocation3], 128
    $region25: #{drgcn_forward.4} parent=1 // pred_fallthru
      _
    %76 = vsyncpa [#allocation3], 1

</llo_original>
